<compile_context>
chip_gen: v7x
topology: tpu7x:2x2x1
jax: 0.10.0
libtpu: 0.0.40
codegen_flags: <defaults>
</compile_context>

<pallas_src>
import functools

import jax
import jax.numpy as jnp
import numpy as np
from jax.experimental import pallas as pl
from jax.experimental.pallas import tpu as pltpu

_EPS = 1e-5

# ConvTranspose2d(k=4, s=2, p=1): output row 2M+a receives input row M+dh through
# kernel row kh.  _T[a] lists the (dh, kh) pairs for row-parity a; the identical
# table applies to columns ((dw, kw) for column-parity b).
_T = {
    0: ((0, 1), (-1, 3)),
    1: ((0, 2), (1, 0)),
}


# --------------------------------------------------------------------------
# Tiny one-time probes so the kernel does not depend on undocumented sign /
# byte-order conventions (cached as Python bools; call the wrapper eagerly once).
# --------------------------------------------------------------------------
_LOW_HALF_FIRST = None


def _bitcast_low_half_first():
    """True iff lax.bitcast_convert_type(u32 -> bf16[..., 2]) puts the LOW 16 bits at index 0."""
    global _LOW_HALF_FIRST
    if _LOW_HALF_FIRST is None:
        probe = jax.lax.bitcast_convert_type(jnp.uint32(0x3F800000), jnp.bfloat16)
        # 0x3F80 (bf16 1.0) lives in the HIGH halfword of the u32.
        if float(probe[1]) == 1.0:
            _LOW_HALF_FIRST = True
        elif float(probe[0]) == 1.0:
            _LOW_HALF_FIRST = False
        else:
            raise AssertionError("unexpected bitcast_convert_type halfword order")
    return _LOW_HALF_FIRST


_ROLL_IS_JNP = None


def _roll_matches_jnp():
    """True iff pltpu.roll(x, s, axis) == jnp.roll(x, s, axis) (out[i] = x[i - s])."""
    global _ROLL_IS_JNP
    if _ROLL_IS_JNP is None:
        def _k(x_ref, o_ref):
            o_ref[...] = pltpu.roll(x_ref[...], 1, axis=1)

        x = jnp.tile(jnp.arange(256, dtype=jnp.float32)[None, :], (8, 1))
        y = pl.pallas_call(_k, out_shape=jax.ShapeDtypeStruct((8, 256), jnp.float32))(x)
        first = float(y[0, 0])
        if first == 255.0:
            _ROLL_IS_JNP = True
        elif first == 1.0:
            _ROLL_IS_JNP = False
        else:
            raise AssertionError("unexpected pltpu.roll convention")
    return _ROLL_IS_JNP


# --------------------------------------------------------------------------
# Kernel
# --------------------------------------------------------------------------
def _upsample_kernel(x_ref, w_ref, mask_ref, drop_ref, o_ref, win_ref, *,
                     H, W, C_in, low_half_first, roll_like_jnp):
    """Fused ConvTranspose2d(4,2,1) + InstanceNorm2d + ReLU + Dropout2d.

    The spatial axis is flattened (L = H*W) and stays on the lane dim throughout.

    x_ref:    (1, C_in, L)          one sample, channels x flattened spatial (bf16)
    w_ref:    (4, c_tile, 4*C_in)   per-parity-plane weights, taps stacked on K (bf16)
    mask_ref: (4, L)                boundary masks: [not_first_row, not_last_row,
                                                     not_first_col, not_last_col]
    drop_ref: (1, c_tile, 1)        Dropout2d per-channel scale (0.0 or 1/keep), f32
    o_ref:    (1, 2, c_tile, L)     u32: row-parity planes with the two column
                                    parities packed as 2 x bf16 per u32 lane
    win_ref:  (4, 4*C_in, L)        persistent VMEM scratch, stacked windows
    """
    L = H * W

    # ---- build the 4 per-plane stacked windows once per sample; the c-tile grid
    #      axis iterates fastest ("arbitrary"), so the scratch is reused for c > 0 ----
    @pl.when(pl.program_id(1) == 0)
    def _build_windows():
        x = x_ref[0]                                              # (C_in, L)
        cache = {}

        def window(dh, dw):
            # window(dh, dw)[c, m*W + p] == x[c, m+dh, p+dw]  (0 outside the image)
            if (dh, dw) in cache:
                return cache[(dh, dw)]
            s = dh * W + dw
            if s == 0:
                y = x
            else:
                amt = (-s) % L if roll_like_jnp else s % L
                y = pltpu.roll(x, amt, axis=1)                    # XLU lane rotate
            if dh == -1:
                y = y * mask_ref[0:1]
            elif dh == 1:
                y = y * mask_ref[1:2]
            if dw == -1:
                y = y * mask_ref[2:3]
            elif dw == 1:
                y = y * mask_ref[3:4]
            cache[(dh, dw)] = y
            return y

        for a in (0, 1):
            for b in (0, 1):
                parts = [window(_T[a][jh][0], _T[b][jw][0])
                         for jh in (0, 1) for jw in (0, 1)]        # 4 x (C_in, L)
                win_ref[2 * a + b] = jnp.concatenate(parts, axis=0)

    # ---- transposed conv: one stacked-contraction matmul per parity plane ----
    # (For very small C this could be done with VPU broadcast-FMAs instead of the
    #  MXU; the matmul form is kept for generality.)
    planes = [jnp.dot(w_ref[i], win_ref[i], preferred_element_type=jnp.float32)
              for i in range(4)]                                   # 4 x (c_tile, L) f32

    # ---- InstanceNorm2d (affine=False, biased variance) over the full 2H x 2W map,
    #      two-pass for numerical robustness ----
    inv_n = 1.0 / (4.0 * L)
    s = None
    for p in planes:
        ps = jnp.sum(p, axis=1, keepdims=True)                     # lane reduction
        s = ps if s is None else s + ps
    mean = s * inv_n                                                # (c_tile, 1)

    dev = [p - mean for p in planes]
    ss = None
    for d in dev:
        pss = jnp.sum(d * d, axis=1, keepdims=True)
        ss = pss if ss is None else ss + pss
    var = ss * inv_n

    # ReLU and Dropout2d fold into one non-negative per-channel scale:
    #   relu((y-mean)*rsqrt) * m  ==  max(y-mean, 0) * (rsqrt * m)
    scale = jax.lax.rsqrt(var + _EPS) * drop_ref[0]                 # (c_tile, 1)

    # ---- normalize, ReLU, dropout, and pack the two column parities of each
    #      row-parity plane into one u32 plane (this u32 IS the 2p+b interleave) ----
    def bf16_in_low(v):   # bf16(v) bits in the low 16 bits of a u32
        f = v.astype(jnp.bfloat16).astype(jnp.float32)
        return pltpu.bitcast(f, jnp.uint32) >> 16

    def bf16_in_high(v):  # bf16(v) bits in the high 16 bits (low 16 already zero)
        f = v.astype(jnp.bfloat16).astype(jnp.float32)
        return pltpu.bitcast(f, jnp.uint32)

    for a in (0, 1):
        y_even = jnp.maximum(dev[2 * a + 0], 0.0) * scale           # output col 2P
        y_odd = jnp.maximum(dev[2 * a + 1], 0.0) * scale            # output col 2P+1
        if low_half_first:
            packed = bf16_in_low(y_even) | bf16_in_high(y_odd)
        else:
            packed = bf16_in_high(y_even) | bf16_in_low(y_odd)
        o_ref[0, a] = packed


# --------------------------------------------------------------------------
# Chip-aware tiling helpers
# --------------------------------------------------------------------------
def _vmem_need(ct, C_in, L, comp_bytes):
    win = 4 * (4 * C_in) * L * comp_bytes           # persistent stacked-window scratch
    xin = 2 * C_in * L * comp_bytes                 # double-buffered input block
    wgt = 2 * 4 * ct * max(4 * C_in, 128) * comp_bytes
    plane = 20 * ct * L * 4                         # raw + centered f32 planes (values)
    outb = 2 * 2 * ct * L * 4                       # double-buffered packed-u32 out block
    return win + xin + wgt + plane + outb + (1 << 20)


def _pick_c_tile(C_out, C_in, L, comp_bytes, budget):
    cands = [C_out] + [c for c in (512, 256, 128, 64, 32, 16, 8)
                       if c < C_out and C_out % c == 0]
    for ct in cands:
        if _vmem_need(ct, C_in, L, comp_bytes) <= budget:
            return ct
    # TODO(synk): very large c_tile*L (e.g. 256x256 decoder stages) needs a
    # two-phase spatially-tiled scheme (conv + partial stats, then normalize);
    # fall back to the smallest channel tile here.
    return cands[-1]


# --------------------------------------------------------------------------
# Wrapper
# --------------------------------------------------------------------------
def upsample_pallas(x_nchw, weight, bias, drop_scale, shortcut=None, *,
                    compute_dtype=jnp.bfloat16, c_tile=None):
    """Forward of the PyTorch `Upsample` block.

    x_nchw:     (N, C_in, H, W)          float32
    weight:     (C_in, C_out, 4, 4)      PyTorch ConvTranspose2d layout
    bias:       (C_out,)                 accepted for API fidelity; it is exactly
                                         cancelled by InstanceNorm2d(affine=False)
    drop_scale: (N, C_out)               Dropout2d channel multipliers (0 or 1/keep)
    shortcut:   optional (N, C_s, 2H, 2W) concatenated on the channel dim
    returns     (N, C_out [+ C_s], 2H, 2W), NCHW float32
    """
    del bias  # mathematically cancelled by the following InstanceNorm2d

    N, C_in, H, W = x_nchw.shape
    C_out = weight.shape[1]
    L = H * W
    comp_bytes = np.dtype(compute_dtype).itemsize

    # ---- chip-aware tiling (v5e/v6e: 128 MiB VMEM, v7x: 64 MiB) ----
    info = None
    try:
        info = pltpu.get_tpu_info()
    except Exception:
        pass
    vmem_cap = int(getattr(info, "vmem_capacity_bytes", 0) or (64 << 20))
    if c_tile is None:
        c_tile = _pick_c_tile(C_out, C_in, L, comp_bytes, int(0.70 * vmem_cap))
    assert C_out % c_tile == 0, (C_out, c_tile)
    n_ct = C_out // c_tile
    vmem_limit = int(min(0.90 * vmem_cap,
                         max(32 << 20, 2 * _vmem_need(c_tile, C_in, L, comp_bytes))))

    # ---- wrapper-side glue (layout-only / tiny) ----
    x_flat = x_nchw.reshape(N, C_in, L).astype(compute_dtype)      # free reshape, NCHW kept
    # Per-plane weights, taps stacked along the contraction axis: (4, C_out, 4*C_in)
    w32 = weight.astype(jnp.float32)
    blocks = []
    for a in (0, 1):
        for b in (0, 1):
            parts = [w32[:, :, _T[a][jh][1], _T[b][jw][1]].T       # (C_out, C_in)
                     for jh in (0, 1) for jw in (0, 1)]
            blocks.append(jnp.concatenate(parts, axis=1))          # (C_out, 4*C_in)
    w_pack = jnp.stack(blocks, axis=0).astype(compute_dtype)       # (4, C_out, 4*C_in)

    # Boundary masks on the flattened spatial axis (static constants).
    lidx = np.arange(L)
    masks = jnp.asarray(np.stack([lidx >= W,                       # not_first_row (dh=-1)
                                  lidx < L - W,                    # not_last_row  (dh=+1)
                                  lidx % W != 0,                   # not_first_col (dw=-1)
                                  lidx % W != W - 1]               # not_last_col  (dw=+1)
                                 ).astype(np.float32)).astype(compute_dtype)

    drop = drop_scale.reshape(N, C_out, 1).astype(jnp.float32)

    kernel = functools.partial(_upsample_kernel, H=H, W=W, C_in=C_in,
                               low_half_first=_bitcast_low_half_first(),
                               roll_like_jnp=_roll_matches_jnp())

    flops = 2 * 4 * N * C_out * (4 * C_in) * L
    bytes_accessed = (N * C_in * L * comp_bytes + 4 * C_out * 4 * C_in * comp_bytes
                      + 4 * L * comp_bytes + N * C_out * 4 + N * 2 * C_out * L * 4)

    out_u32 = pl.pallas_call(
        kernel,
        out_shape=jax.ShapeDtypeStruct((N, 2, C_out, L), jnp.uint32),
        grid_spec=pltpu.PrefetchScalarGridSpec(
            num_scalar_prefetch=0,
            grid=(N, n_ct),
            in_specs=[
                pl.BlockSpec((1, C_in, L), lambda n, c: (n, 0, 0)),
                pl.BlockSpec((4, c_tile, 4 * C_in), lambda n, c: (0, c, 0)),
                pl.BlockSpec((4, L), lambda n, c: (0, 0)),
                pl.BlockSpec((1, c_tile, 1), lambda n, c: (n, c, 0)),
            ],
            out_specs=pl.BlockSpec((1, 2, c_tile, L), lambda n, c: (n, 0, c, 0)),
            scratch_shapes=[pltpu.VMEM((4, 4 * C_in, L), compute_dtype)],
        ),
        # The window scratch is reused across C_out tiles, so the c axis must stay
        # "arbitrary"; only the batch axis is sharded across TensorCores.
        # (For N == 1 on v7x one could instead mark c "parallel" and rebuild the
        #  windows per tile.)
        compiler_params=pltpu.CompilerParams(
            dimension_semantics=("parallel", "arbitrary"),
            vmem_limit_bytes=vmem_limit),
        cost_estimate=pl.CostEstimate(flops=flops, transcendentals=N * C_out,
                                      bytes_accessed=bytes_accessed),
    )(x_flat, w_pack, masks, drop)

    # ---- unpack: free bitcast does the column interleave; the remaining row
    #      interleave is a row-granular transpose (contiguous 2W runs). ----
    v = jax.lax.bitcast_convert_type(out_u32, jnp.bfloat16)        # (N, 2, C_out, L, 2)
    v = v.reshape(N, 2, C_out, H, 2 * W)                           # free reshape
    y = jnp.transpose(v, (0, 2, 3, 1, 4))                          # (N, C_out, H, 2, 2W)
    y = y.reshape(N, C_out, 2 * H, 2 * W).astype(jnp.float32)

    if shortcut is not None:
        y = jnp.concatenate([y, shortcut.astype(y.dtype)], axis=1)
    return y


# --------------------------------------------------------------------------
# Pure-JAX reference (includes the conv bias to demonstrate its cancellation)
# --------------------------------------------------------------------------
def upsample_reference(x, weight, bias, drop_scale):
    N, C_in, H, W = x.shape
    C_out = weight.shape[1]
    # ConvTranspose2d == lhs-dilated conv with flipped, IO-swapped kernel, pad = k-1-p = 2
    w_conv = jnp.transpose(jnp.flip(weight, axis=(2, 3)), (1, 0, 2, 3))
    y = jax.lax.conv_general_dilated(
        x.astype(jnp.float32), w_conv.astype(jnp.float32),
        window_strides=(1, 1), padding=((2, 2), (2, 2)), lhs_dilation=(2, 2),
        dimension_numbers=("NCHW", "OIHW", "NCHW"))
    y = y + bias.reshape(1, C_out, 1, 1)
    mean = y.mean(axis=(2, 3), keepdims=True)
    var = ((y - mean) ** 2).mean(axis=(2, 3), keepdims=True)
    y = (y - mean) / jnp.sqrt(var + _EPS)
    y = jnp.maximum(y, 0.0)
    y = y * drop_scale.reshape(N, C_out, 1, 1)
    return y


if __name__ == "__main__":
    key = jax.random.PRNGKey(0)
    kx, kw, kb, km, ks = jax.random.split(key, 5)

    N, C_in, C_out, H, W = 2, 4, 4, 16, 16
    x = jax.random.normal(kx, (N, C_in, H, W), dtype=jnp.float32)
    weight = 0.1 * jax.random.normal(kw, (C_in, C_out, 4, 4), dtype=jnp.float32)
    bias = 0.1 * jax.random.normal(kb, (C_out,), dtype=jnp.float32)

    # Dropout2d(0.5) training-mode channel mask.
    # TODO(synk): PyTorch's RNG stream is not reproducible in JAX; the channel mask
    # is drawn with JAX RNG and passed in as explicit per-channel multipliers.
    keep = jax.random.bernoulli(km, 0.5, (N, C_out))
    drop_scale = keep.astype(jnp.float32) / 0.5

    shortcut = jax.random.normal(ks, (N, 3, 2 * H, 2 * W), dtype=jnp.float32)

    out = upsample_pallas(x, weight, bias, drop_scale, shortcut=shortcut)
    out = jax.block_until_ready(out)
    assert out.shape == (N, C_out + 3, 2 * H, 2 * W), out.shape

    ref = upsample_reference(x, weight, bias, drop_scale)
    ref = jnp.concatenate([ref, shortcut], axis=1)
    # bf16 matmul inputs + bf16-packed output => relaxed tolerance vs the f32 reference.
    np.testing.assert_allclose(np.asarray(out), np.asarray(ref), atol=8e-2, rtol=5e-2)

    print("KERNEL_OK")
</pallas_src>

<mosaic_0001>
module attributes {stable_mosaic.version = 11 : i64} {
  func.func @_k(%arg0: memref<8x256xf32, #tpu.memory_space<vmem>>, %arg1: memref<8x256xf32, #tpu.memory_space<vmem>>) attributes {dimension_semantics = [], scalar_prefetch = 0 : i64, scratch_operands = 0 : i64, tpu.core_type = #tpu.core_type<tc>} {
    %c0 = arith.constant 0 : index
    %c0_0 = arith.constant 0 : index
    %0 = vector.load %arg0[%c0, %c0_0] : memref<8x256xf32, #tpu.memory_space<vmem>>, vector<8x256xf32>
    %c1_i32 = arith.constant 1 : i32
    %1 = tpu.dynamic_rotate %0 by %c1_i32 dim 1 : vector<8x256xf32>, i32 -> vector<8x256xf32>
    %c0_1 = arith.constant 0 : index
    %c0_2 = arith.constant 0 : index
    %2 = vector.load %arg1[%c0_1, %c0_2] : memref<8x256xf32, #tpu.memory_space<vmem>>, vector<8x256xf32>
    tpu.vector_store %arg1[%c0_1, %c0_2], %1 {strides = array<i32>} : memref<8x256xf32, #tpu.memory_space<vmem>>, vector<8x256xf32>,
    return
  }
}

</mosaic_0001>

<llo_original>
// kernel: tpu_custom_call.1
$region0: #{tpu_custom_call.1}
  #allocation0 [shape = 'u32[]', space=smem, size = 0x4, offset = 0x4, fixed_abs, tag = 'smem constant byte address 0x4 - core index']
  #allocation1 [shape = 'u32[144,128]{1,0:T(1,128)}', space=vmem, size = 0x12000, scoped, tag = 'internal scratch']
  %s0 = inlined_call_operand.hbm [shape: f32[8,256], index: 0, kind: input, shape index: {}]
  %s1 = inlined_call_operand.hbm [shape: f32[8,256], index: 1, kind: output, shape index: {}]
  %s2 = sld [smem:[#allocation0]]
  $region18: #{tpu_custom_call.1} parent=0
    _
  %s4 = ssub.s32 1, %s2
  %s5 = scalar_select 0, %s4, %s2
  $region1: #{tpu_custom_call.1} parent=0
    #allocation2 [shape = 'u8[8192]{0}', space=vmem, size = 0x2000, scoped, tag = 'input window, operand 0, single buffered']
    #allocation3 [shape = 's32[1]{0}', space=sflag, size = 0x4, scoped, tag = 'scoped memory for tpu_custom_call.1']
    #allocation4 [shape = 's32[1]{0}', space=sflag, size = 0x4, scoped, tag = 'scoped memory for tpu_custom_call.1']
    #allocation5 [shape = 'u8[8192]{0}', space=vmem, size = 0x2000, scoped, tag = 'output window, operand 0, single buffered']
    %6 = vsyncpa [#allocation3], 0
    %7 = vsyncpa [#allocation4], 0
    // Predicated region
    $region2: #{tpu_custom_call.1} parent=1 // pred_check
      _
    $region3: #{tpu_custom_call.1} parent=1 // pred_check_branch
      %9 = sbr.rel (0) target = $region5
    $region4: #{tpu_custom_call.1} parent=1 // pred_region
      %s11 = ssub.s32 256, 256
      %12 = vsyncadd [#allocation3], %s11
      %s14 = sshll.u32 [#allocation2], 4
      %s15 = int_to_ptr.vmem [resolvable:$true] %s14
      %17 = dma.hbm_to_vmem [thread:$0]  %s0, 256, %s15, [#allocation3]
    $region5: #{tpu_custom_call.1} parent=1 // pred_fallthru
      _
    // Predicated region
    $region6: #{tpu_custom_call.1} parent=1 // pred_check
      _
    $region7: #{tpu_custom_call.1} parent=1 // pred_check_branch
      %19 = sbr.rel (0) target = $region9
    $region8: #{tpu_custom_call.1} parent=1 // pred_region
      %20 = dma.done [#allocation3], 256
    $region9: #{tpu_custom_call.1} parent=1 // pred_fallthru
      _
    %v21 = vld [vmem:[#allocation2] sm:$0xff]
    %v22 = vld [vmem:[#allocation2 + $0x8] sm:$0xff]
    %23 = vrot.lane.b32.xlu0 %v21, 1
    %v24 = vpop.permute.xlu0 %23
    %25 = vrot.lane.b32.xlu0 %v22, 1
    %v26 = vpop.permute.xlu0 %25
    %v27 = vlaneseq
    %v28 = vand.u32 %v27, 127
    %vm29 = vcmp.lt.s32.totalorder %v28, 1
    %v30 = vsel %vm29, %v24, %v26
    %v31 = vsel %vm29, %v26, %v24
    %32 = vst [vmem:[#allocation5] sm:$0xff] %v31
    %33 = vst [vmem:[#allocation5 + $0x8] sm:$0xff] %v30
    // Predicated region
    $region10: #{tpu_custom_call.1} parent=1 // pred_check
      _
    $region11: #{tpu_custom_call.1} parent=1 // pred_check_branch
      %35 = sbr.rel (0) target = $region13
    $region12: #{tpu_custom_call.1} parent=1 // pred_region
      %s37 = ssub.s32 256, 256
      %38 = vsyncadd [#allocation4], %s37
      %s40 = sshll.u32 [#allocation5], 4
      %s41 = int_to_ptr.vmem [resolvable:$true] %s40
      %43 = dma.vmem_to_hbm [thread:$0]  %s41, 256, %s1, [#allocation4]
    $region13: #{tpu_custom_call.1} parent=1 // pred_fallthru
      _
    // Predicated region
    $region14: #{tpu_custom_call.1} parent=1 // pred_check
      _
    $region15: #{tpu_custom_call.1} parent=1 // pred_check_branch
      %45 = sbr.rel (0) target = $region17
    $region16: #{tpu_custom_call.1} parent=1 // pred_region
      %46 = dma.done [#allocation4], 256
    $region17: #{tpu_custom_call.1} parent=1 // pred_fallthru
      _
    %47 = vsyncpa [#allocation3], 1
    %48 = vsyncpa [#allocation4], 1

</llo_original>
